<compile_context>
chip_gen: v6e
topology: v6e:2x2x1
jax: 0.10.0
libtpu: 0.0.40
codegen_flags: <defaults>
</compile_context>

<pallas_src>
import jax
import jax.numpy as jnp
from jax.experimental import pallas as pl
from jax.experimental.pallas import tpu as pltpu

EPS = 1e-5
KS = 3       # conv kernel size
LANE = 128   # TPU lane width


def _round_up(n, m):
    return (n + m - 1) // m * m


# ---------------------------------------------------------------------------
# Wrapper-side weight preprocessing: banded weight matrices (vectorized build).
#
# With an input slab laid out as (rows = y, lanes = (x, ci)), a VALID 3x3 conv
# row-tap ky contributes  in[y+ky, :] @ M[ky]  where
#     M[ky][(x+kx)*Cin+ci, x*Cout+co] = w[ky, kx, ci, co].
# For conv1 we additionally fold ky into the contraction dim (the wrapper
# concatenates the 3 row-shifted slabs along lanes), giving one matrix of shape
# (3*W*Cin, W1*Cout).  Output columns are zero-padded to a multiple of 128.
# ---------------------------------------------------------------------------
def build_banded_weights(w1_hwio, w2_hwio, W, Cin, Cout):
    W1 = W - (KS - 1)
    W2 = W1 - (KS - 1)
    P1 = _round_up(W1 * Cout, LANE)
    P2 = _round_up(W2 * Cout, LANE)

    def selector(w_in, w_out):
        # S[kx, x_in, x_out] = 1 iff x_in == x_out + kx
        kx = jnp.arange(KS)[:, None, None]
        xi = jnp.arange(w_in)[None, :, None]
        xo = jnp.arange(w_out)[None, None, :]
        return (xi == xo + kx).astype(jnp.float32)

    # conv1: ky folded into contraction -> (3*W*Cin, P1)
    s1 = selector(W, W1)                                          # (3, W, W1)
    m1 = jnp.einsum("apq,yacd->ypcqd", s1, w1_hwio)               # (3, W, Cin, W1, Cout)
    m1 = m1.reshape(KS * W * Cin, W1 * Cout)
    m1 = jnp.pad(m1, ((0, 0), (0, P1 - W1 * Cout)))

    # conv2: per-ky banded matrices, contraction over the padded W1*Cout lanes.
    # TODO(synk): for large W the banded form wastes ~W/3x MXU FLOPs on zeros
    # (matters first on v5e); switch to per-x-block tiles if W grows.
    s2 = selector(W1, W2)                                         # (3, W1, W2)
    m2 = jnp.einsum("apq,yacd->ypcqd", s2, w2_hwio)               # (3, W1, Cout, W2, Cout)
    m2 = m2.reshape(KS, W1 * Cout, W2 * Cout)
    m2 = jnp.pad(m2, ((0, 0), (0, P1 - W1 * Cout), (0, P2 - W2 * Cout)))

    return m1.astype(jnp.bfloat16), m2.astype(jnp.bfloat16), P1, P2


# ---------------------------------------------------------------------------
# Fused kernel: conv1 -> train-mode BN -> ReLU -> conv2 (+ b2).
# ---------------------------------------------------------------------------
def make_fused_kernel(N, H, W, Cin, Cout, P1, P2):
    H1 = H - (KS - 1)
    H2 = H1 - (KS - 1)

    def kernel(xcat_ref, w1_ref, w2_ref, g_ref, gamma_ref, beta_ref, b2_ref,
               o_ref):
        # xcat_ref:  (N*H1, 3*W*Cin)  bf16   (ky taps folded into lanes)
        # w1_ref:    (3*W*Cin, P1)    bf16   (banded, ky folded into rows)
        # w2_ref:    (3, P1, P2)      bf16   (banded, per ky)
        # g_ref:     (P1, P1)         f32    (block-identity / n_valid)
        # gamma/beta:(1, P1)          f32    (lane-tiled over x, zero-padded)
        # b2_ref:    (1, P2)          f32
        # o_ref:     (N*H2, P2)       f32    (lane-dense, 128-wide store)

        # --- conv1: one MXU matmul, M = N*H1, K = 3*W*Cin ---
        h1 = jnp.dot(xcat_ref[...], w1_ref[...],
                     preferred_element_type=jnp.float32)          # (N*H1, P1)

        # --- train-mode BatchNorm statistics, folded per channel via MXU ---
        s_row = jnp.sum(h1, axis=0, keepdims=True)                # (1, P1)
        ss_row = jnp.sum(h1 * h1, axis=0, keepdims=True)          # (1, P1)
        mean_t = jnp.dot(s_row, g_ref[...],
                         preferred_element_type=jnp.float32)      # (1, P1)
        ex2_t = jnp.dot(ss_row, g_ref[...],
                        preferred_element_type=jnp.float32)
        var_t = ex2_t - mean_t * mean_t
        scale = gamma_ref[...] * jax.lax.rsqrt(var_t + EPS)
        shift = beta_ref[...] - mean_t * scale

        # --- normalize + ReLU; single hoisted bf16 cast for the conv2 operand ---
        h1r = jnp.maximum(h1 * scale + shift, 0.0).astype(jnp.bfloat16)

        # --- conv2: per-image (rows of different images must not mix across ky) ---
        for n in range(N):
            acc = jnp.zeros((H2, P2), jnp.float32)
            for ky in range(KS):
                r0 = n * H1 + ky
                acc = acc + jnp.dot(h1r[r0:r0 + H2, :], w2_ref[ky],
                                    preferred_element_type=jnp.float32)
            o_ref[n * H2:(n + 1) * H2, :] = acc + b2_ref[...]

    return kernel


# ---------------------------------------------------------------------------
# Forward wrapper: NCHW in / NCHW out.
# ---------------------------------------------------------------------------
def downblock_forward(x_nchw, params):
    N, Cin, H, W = x_nchw.shape
    Cout = params["w1"].shape[0]
    H1, W1 = H - (KS - 1), W - (KS - 1)
    H2, W2 = H1 - (KS - 1), W1 - (KS - 1)

    # ---- layout plumbing (wrapper / XLA side) ----
    x_nhwc = jnp.transpose(x_nchw, (0, 2, 3, 1))                  # (N, H, W, Cin)
    # Fold the 3 ky taps into the contraction dim, batch all images along rows.
    xcat = jnp.concatenate(
        [x_nhwc[:, ky:ky + H1].reshape(N, H1, W * Cin) for ky in range(KS)],
        axis=2,
    ).reshape(N * H1, KS * W * Cin).astype(jnp.bfloat16)          # (N*H1, 3*W*Cin)

    w1_hwio = jnp.transpose(params["w1"], (2, 3, 1, 0)).astype(jnp.float32)
    w2_hwio = jnp.transpose(params["w2"], (2, 3, 1, 0)).astype(jnp.float32)
    w1b, w2b, P1, P2 = build_banded_weights(w1_hwio, w2_hwio, W, Cin, Cout)

    # Block-identity fold matrix: sums stats over x positions per channel and
    # re-broadcasts over x, with the 1/n_valid normalization folded in.
    n_valid = N * H1 * W1
    g = jnp.tile(jnp.eye(Cout, dtype=jnp.float32), (W1, W1)) / n_valid
    g = jnp.pad(g, ((0, P1 - W1 * Cout), (0, P1 - W1 * Cout)))    # (P1, P1)

    def lane_tile(v, reps, width):
        t = jnp.tile(v.astype(jnp.float32), reps)
        return jnp.pad(t, (0, width - t.shape[0])).reshape(1, width)

    gamma_t = lane_tile(params["gamma"], W1, P1)
    beta_t = lane_tile(params["beta"], W1, P1)
    b2_t = lane_tile(params["b2"], W2, P2)
    # NOTE: params["b1"] intentionally unused: train-mode BN mean subtraction
    # cancels a constant per-channel bias added before the norm.

    out_flat = pl.pallas_call(
        make_fused_kernel(N, H, W, Cin, Cout, P1, P2),
        out_shape=jax.ShapeDtypeStruct((N * H2, P2), jnp.float32),
        grid=(1,),
        in_specs=[
            pl.BlockSpec((N * H1, KS * W * Cin), lambda i: (0, 0)),
            pl.BlockSpec((KS * W * Cin, P1), lambda i: (0, 0)),
            pl.BlockSpec((KS, P1, P2), lambda i: (0, 0, 0)),
            pl.BlockSpec((P1, P1), lambda i: (0, 0)),
            pl.BlockSpec((1, P1), lambda i: (0, 0)),
            pl.BlockSpec((1, P1), lambda i: (0, 0)),
            pl.BlockSpec((1, P2), lambda i: (0, 0)),
        ],
        out_specs=pl.BlockSpec((N * H2, P2), lambda i: (0, 0)),
        compiler_params=pltpu.CompilerParams(
            dimension_semantics=("arbitrary",),
            vmem_limit_bytes=32 * 1024 * 1024,   # fits v7x's smaller VMEM budget
        ),
    )(xcat, w1b, w2b, g, gamma_t, beta_t, b2_t)

    out = out_flat[:, :W2 * Cout].reshape(N, H2, W2, Cout)        # drop lane pad
    return jnp.transpose(out, (0, 3, 1, 2))                       # NCHW


# ---------------------------------------------------------------------------
# Pure-JAX reference (same math as the PyTorch module, XLA convs).
# ---------------------------------------------------------------------------
def downblock_ref(x_nchw, params):
    x = jnp.transpose(x_nchw, (0, 2, 3, 1))            # NHWC
    w1 = jnp.transpose(params["w1"], (2, 3, 1, 0))     # HWIO
    w2 = jnp.transpose(params["w2"], (2, 3, 1, 0))
    dn = ("NHWC", "HWIO", "NHWC")
    h = jax.lax.conv_general_dilated(x, w1, (1, 1), "VALID",
                                     dimension_numbers=dn) + params["b1"]
    mean = jnp.mean(h, axis=(0, 1, 2), keepdims=True)
    var = jnp.mean((h - mean) ** 2, axis=(0, 1, 2), keepdims=True)
    h = (h - mean) * jax.lax.rsqrt(var + EPS)
    h = h * params["gamma"] + params["beta"]
    h = jnp.maximum(h, 0.0)
    o = jax.lax.conv_general_dilated(h, w2, (1, 1), "VALID",
                                     dimension_numbers=dn) + params["b2"]
    return jnp.transpose(o, (0, 3, 1, 2))


if __name__ == "__main__":
    N, Cin, Cout, H, W = 2, 4, 8, 16, 16
    key = jax.random.PRNGKey(0)
    kx, k1, kb1, k2, kb2 = jax.random.split(key, 5)
    x = jax.random.normal(kx, (N, Cin, H, W), jnp.float32)
    params = dict(
        w1=jax.random.normal(k1, (Cout, Cin, KS, KS), jnp.float32) * 0.1,
        b1=jax.random.normal(kb1, (Cout,), jnp.float32) * 0.1,
        gamma=jnp.ones((Cout,), jnp.float32),   # BatchNorm2d default affine init
        beta=jnp.zeros((Cout,), jnp.float32),
        w2=jax.random.normal(k2, (Cout, Cout, KS, KS), jnp.float32) * 0.1,
        b2=jax.random.normal(kb2, (Cout,), jnp.float32) * 0.1,
    )

    out = downblock_forward(x, params)
    out = jax.block_until_ready(out)
    assert out.shape == (N, Cout, H - 4, W - 4), out.shape

    ref = downblock_ref(x, params)
    err = float(jnp.max(jnp.abs(out - ref)))
    if err > 5e-2:   # both convs run with bf16 MXU operands / f32 accumulation
        raise AssertionError(f"mismatch vs reference, max abs err = {err}")
    print("KERNEL_OK")
</pallas_src>

<mosaic_0001>
module attributes {stable_mosaic.version = 11 : i64} {
  func.func @kernel(%arg0: i32, %arg1: memref<28x192xbf16, #tpu.memory_space<vmem>>, %arg2: memref<192x128xbf16, #tpu.memory_space<vmem>>, %arg3: memref<3x128x128xbf16, #tpu.memory_space<vmem>>, %arg4: memref<128x128xf32, #tpu.memory_space<vmem>>, %arg5: memref<1x128xf32, #tpu.memory_space<vmem>>, %arg6: memref<1x128xf32, #tpu.memory_space<vmem>>, %arg7: memref<1x128xf32, #tpu.memory_space<vmem>>, %arg8: memref<24x128xf32, #tpu.memory_space<vmem>>) attributes {dimension_semantics = [#tpu.dimension_semantics<arbitrary>], iteration_bounds = array<i64: 1>, scalar_prefetch = 0 : i64, scratch_operands = 0 : i64, tpu.core_type = #tpu.core_type<tc>, window_params = [{pipeline_mode = #tpu.pipeline_mode<synchronous>, transform_indices = @transform_0, window_bounds = array<i64: 28, 192>}, {pipeline_mode = #tpu.pipeline_mode<synchronous>, transform_indices = @transform_1, window_bounds = array<i64: 192, 128>}, {pipeline_mode = #tpu.pipeline_mode<synchronous>, transform_indices = @transform_2, window_bounds = array<i64: 3, 128, 128>}, {pipeline_mode = #tpu.pipeline_mode<synchronous>, transform_indices = @transform_3, window_bounds = array<i64: 128, 128>}, {pipeline_mode = #tpu.pipeline_mode<synchronous>, transform_indices = @transform_4, window_bounds = array<i64: 1, 128>}, {pipeline_mode = #tpu.pipeline_mode<synchronous>, transform_indices = @transform_5, window_bounds = array<i64: 1, 128>}, {pipeline_mode = #tpu.pipeline_mode<synchronous>, transform_indices = @transform_6, window_bounds = array<i64: 1, 128>}, {pipeline_mode = #tpu.pipeline_mode<synchronous>, transform_indices = @transform_7, window_bounds = array<i64: 24, 128>}]} {
    %c0 = arith.constant 0 : index
    %c0_0 = arith.constant 0 : index
    %0 = vector.load %arg1[%c0, %c0_0] : memref<28x192xbf16, #tpu.memory_space<vmem>>, vector<28x192xbf16>
    %c0_1 = arith.constant 0 : index
    %c0_2 = arith.constant 0 : index
    %1 = vector.load %arg2[%c0_1, %c0_2] : memref<192x128xbf16, #tpu.memory_space<vmem>>, vector<192x128xbf16>
    %cst = arith.constant dense<0.000000e+00> : vector<28x128xf32>
    %2 = tpu.matmul %0, %1, %cst {dimension_numbers = #tpu.dot_dimension_numbers<[1], [0], [0], [1], [0, 0, 1, 1], [], []>} : vector<28x192xbf16>, vector<192x128xbf16>, vector<28x128xf32> -> vector<28x128xf32>
    %cst_3 = arith.constant dense<0.000000e+00> : vector<128xf32>
    %3 = vector.multi_reduction <add>, %2, %cst_3 [0] : vector<28x128xf32> to vector<128xf32>
    %4 = vector.shape_cast %3 : vector<128xf32> to vector<1x128xf32>
    %5 = arith.mulf %2, %2 : vector<28x128xf32>
    %cst_4 = arith.constant dense<0.000000e+00> : vector<128xf32>
    %6 = vector.multi_reduction <add>, %5, %cst_4 [0] : vector<28x128xf32> to vector<128xf32>
    %7 = vector.shape_cast %6 : vector<128xf32> to vector<1x128xf32>
    %c0_5 = arith.constant 0 : index
    %c0_6 = arith.constant 0 : index
    %8 = vector.load %arg4[%c0_5, %c0_6] : memref<128x128xf32, #tpu.memory_space<vmem>>, vector<128x128xf32>
    %cst_7 = arith.constant dense<0.000000e+00> : vector<1x128xf32>
    %9 = tpu.matmul %4, %8, %cst_7 {dimension_numbers = #tpu.dot_dimension_numbers<[1], [0], [0], [1], [0, 0, 1, 1], [], []>} : vector<1x128xf32>, vector<128x128xf32>, vector<1x128xf32> -> vector<1x128xf32>
    %c0_8 = arith.constant 0 : index
    %c0_9 = arith.constant 0 : index
    %10 = vector.load %arg4[%c0_8, %c0_9] : memref<128x128xf32, #tpu.memory_space<vmem>>, vector<128x128xf32>
    %cst_10 = arith.constant dense<0.000000e+00> : vector<1x128xf32>
    %11 = tpu.matmul %7, %10, %cst_10 {dimension_numbers = #tpu.dot_dimension_numbers<[1], [0], [0], [1], [0, 0, 1, 1], [], []>} : vector<1x128xf32>, vector<128x128xf32>, vector<1x128xf32> -> vector<1x128xf32>
    %12 = arith.mulf %9, %9 : vector<1x128xf32>
    %13 = arith.subf %11, %12 : vector<1x128xf32>
    %c0_11 = arith.constant 0 : index
    %c0_12 = arith.constant 0 : index
    %14 = vector.load %arg5[%c0_11, %c0_12] : memref<1x128xf32, #tpu.memory_space<vmem>>, vector<1x128xf32>
    %cst_13 = arith.constant 9.99999974E-6 : f32
    %15 = vector.broadcast %cst_13 : f32 to vector<1x128xf32>
    %16 = arith.addf %13, %15 : vector<1x128xf32>
    %17 = math.rsqrt %16 : vector<1x128xf32>
    %18 = arith.mulf %14, %17 : vector<1x128xf32>
    %c0_14 = arith.constant 0 : index
    %c0_15 = arith.constant 0 : index
    %19 = vector.load %arg6[%c0_14, %c0_15] : memref<1x128xf32, #tpu.memory_space<vmem>>, vector<1x128xf32>
    %20 = arith.mulf %9, %18 : vector<1x128xf32>
    %21 = arith.subf %19, %20 : vector<1x128xf32>
    %22 = vector.broadcast %18 : vector<1x128xf32> to vector<28x128xf32>
    %23 = arith.mulf %2, %22 : vector<28x128xf32>
    %24 = vector.broadcast %21 : vector<1x128xf32> to vector<28x128xf32>
    %25 = arith.addf %23, %24 : vector<28x128xf32>
    %cst_16 = arith.constant 0.000000e+00 : f32
    %26 = vector.broadcast %cst_16 : f32 to vector<28x128xf32>
    %27 = arith.maximumf %25, %26 : vector<28x128xf32>
    %28 = arith.truncf %27 : vector<28x128xf32> to vector<28x128xbf16>
    %cst_17 = arith.constant 0.000000e+00 : f32
    %29 = vector.broadcast %cst_17 : f32 to vector<12x128xf32>
    %30 = vector.extract_strided_slice %28 {offsets = [0, 0], sizes = [12, 128], strides = [1, 1]} : vector<28x128xbf16> to vector<12x128xbf16>
    %c0_18 = arith.constant 0 : index
    %c0_19 = arith.constant 0 : index
    %c0_20 = arith.constant 0 : index
    %31 = vector.load %arg3[%c0_18, %c0_19, %c0_20] : memref<3x128x128xbf16, #tpu.memory_space<vmem>>, vector<1x128x128xbf16>
    %32 = vector.shape_cast %31 : vector<1x128x128xbf16> to vector<128x128xbf16>
    %cst_21 = arith.constant dense<0.000000e+00> : vector<12x128xf32>
    %33 = tpu.matmul %30, %32, %cst_21 {dimension_numbers = #tpu.dot_dimension_numbers<[1], [0], [0], [1], [0, 0, 1, 1], [], []>} : vector<12x128xbf16>, vector<128x128xbf16>, vector<12x128xf32> -> vector<12x128xf32>
    %34 = arith.addf %29, %33 : vector<12x128xf32>
    %35 = vector.extract_strided_slice %28 {offsets = [1, 0], sizes = [12, 128], strides = [1, 1]} : vector<28x128xbf16> to vector<12x128xbf16>
    %c1 = arith.constant 1 : index
    %c0_22 = arith.constant 0 : index
    %c0_23 = arith.constant 0 : index
    %36 = vector.load %arg3[%c1, %c0_22, %c0_23] : memref<3x128x128xbf16, #tpu.memory_space<vmem>>, vector<1x128x128xbf16>
    %37 = vector.shape_cast %36 : vector<1x128x128xbf16> to vector<128x128xbf16>
    %cst_24 = arith.constant dense<0.000000e+00> : vector<12x128xf32>
    %38 = tpu.matmul %35, %37, %cst_24 {dimension_numbers = #tpu.dot_dimension_numbers<[1], [0], [0], [1], [0, 0, 1, 1], [], []>} : vector<12x128xbf16>, vector<128x128xbf16>, vector<12x128xf32> -> vector<12x128xf32>
    %39 = arith.addf %34, %38 : vector<12x128xf32>
    %40 = vector.extract_strided_slice %28 {offsets = [2, 0], sizes = [12, 128], strides = [1, 1]} : vector<28x128xbf16> to vector<12x128xbf16>
    %c2 = arith.constant 2 : index
    %c0_25 = arith.constant 0 : index
    %c0_26 = arith.constant 0 : index
    %41 = vector.load %arg3[%c2, %c0_25, %c0_26] : memref<3x128x128xbf16, #tpu.memory_space<vmem>>, vector<1x128x128xbf16>
    %42 = vector.shape_cast %41 : vector<1x128x128xbf16> to vector<128x128xbf16>
    %cst_27 = arith.constant dense<0.000000e+00> : vector<12x128xf32>
    %43 = tpu.matmul %40, %42, %cst_27 {dimension_numbers = #tpu.dot_dimension_numbers<[1], [0], [0], [1], [0, 0, 1, 1], [], []>} : vector<12x128xbf16>, vector<128x128xbf16>, vector<12x128xf32> -> vector<12x128xf32>
    %44 = arith.addf %39, %43 : vector<12x128xf32>
    %c0_28 = arith.constant 0 : index
    %c0_29 = arith.constant 0 : index
    %45 = vector.load %arg7[%c0_28, %c0_29] : memref<1x128xf32, #tpu.memory_space<vmem>>, vector<1x128xf32>
    %46 = vector.broadcast %45 : vector<1x128xf32> to vector<12x128xf32>
    %47 = arith.addf %44, %46 : vector<12x128xf32>
    %c0_30 = arith.constant 0 : index
    %c0_31 = arith.constant 0 : index
    %48 = vector.load %arg8[%c0_30, %c0_31] : memref<24x128xf32, #tpu.memory_space<vmem>>, vector<12x128xf32>
    tpu.vector_store %arg8[%c0_30, %c0_31], %47 {strides = array<i32>} : memref<24x128xf32, #tpu.memory_space<vmem>>, vector<12x128xf32>,
    %cst_32 = arith.constant 0.000000e+00 : f32
    %49 = vector.broadcast %cst_32 : f32 to vector<12x128xf32>
    %50 = vector.extract_strided_slice %28 {offsets = [14, 0], sizes = [12, 128], strides = [1, 1]} : vector<28x128xbf16> to vector<12x128xbf16>
    %c0_33 = arith.constant 0 : index
    %c0_34 = arith.constant 0 : index
    %c0_35 = arith.constant 0 : index
    %51 = vector.load %arg3[%c0_33, %c0_34, %c0_35] : memref<3x128x128xbf16, #tpu.memory_space<vmem>>, vector<1x128x128xbf16>
    %52 = vector.shape_cast %51 : vector<1x128x128xbf16> to vector<128x128xbf16>
    %cst_36 = arith.constant dense<0.000000e+00> : vector<12x128xf32>
    %53 = tpu.matmul %50, %52, %cst_36 {dimension_numbers = #tpu.dot_dimension_numbers<[1], [0], [0], [1], [0, 0, 1, 1], [], []>} : vector<12x128xbf16>, vector<128x128xbf16>, vector<12x128xf32> -> vector<12x128xf32>
    %54 = arith.addf %49, %53 : vector<12x128xf32>
    %55 = vector.extract_strided_slice %28 {offsets = [15, 0], sizes = [12, 128], strides = [1, 1]} : vector<28x128xbf16> to vector<12x128xbf16>
    %c1_37 = arith.constant 1 : index
    %c0_38 = arith.constant 0 : index
    %c0_39 = arith.constant 0 : index
    %56 = vector.load %arg3[%c1_37, %c0_38, %c0_39] : memref<3x128x128xbf16, #tpu.memory_space<vmem>>, vector<1x128x128xbf16>
    %57 = vector.shape_cast %56 : vector<1x128x128xbf16> to vector<128x128xbf16>
    %cst_40 = arith.constant dense<0.000000e+00> : vector<12x128xf32>
    %58 = tpu.matmul %55, %57, %cst_40 {dimension_numbers = #tpu.dot_dimension_numbers<[1], [0], [0], [1], [0, 0, 1, 1], [], []>} : vector<12x128xbf16>, vector<128x128xbf16>, vector<12x128xf32> -> vector<12x128xf32>
    %59 = arith.addf %54, %58 : vector<12x128xf32>
    %60 = vector.extract_strided_slice %28 {offsets = [16, 0], sizes = [12, 128], strides = [1, 1]} : vector<28x128xbf16> to vector<12x128xbf16>
    %c2_41 = arith.constant 2 : index
    %c0_42 = arith.constant 0 : index
    %c0_43 = arith.constant 0 : index
    %61 = vector.load %arg3[%c2_41, %c0_42, %c0_43] : memref<3x128x128xbf16, #tpu.memory_space<vmem>>, vector<1x128x128xbf16>
    %62 = vector.shape_cast %61 : vector<1x128x128xbf16> to vector<128x128xbf16>
    %cst_44 = arith.constant dense<0.000000e+00> : vector<12x128xf32>
    %63 = tpu.matmul %60, %62, %cst_44 {dimension_numbers = #tpu.dot_dimension_numbers<[1], [0], [0], [1], [0, 0, 1, 1], [], []>} : vector<12x128xbf16>, vector<128x128xbf16>, vector<12x128xf32> -> vector<12x128xf32>
    %64 = arith.addf %59, %63 : vector<12x128xf32>
    %c0_45 = arith.constant 0 : index
    %c0_46 = arith.constant 0 : index
    %65 = vector.load %arg7[%c0_45, %c0_46] : memref<1x128xf32, #tpu.memory_space<vmem>>, vector<1x128xf32>
    %66 = vector.broadcast %65 : vector<1x128xf32> to vector<12x128xf32>
    %67 = arith.addf %64, %66 : vector<12x128xf32>
    %c12 = arith.constant 12 : index
    %c0_47 = arith.constant 0 : index
    %68 = vector.load %arg8[%c12, %c0_47] : memref<24x128xf32, #tpu.memory_space<vmem>>, vector<12x128xf32>
    tpu.vector_store %arg8[%c12, %c0_47], %67 {strides = array<i32>} : memref<24x128xf32, #tpu.memory_space<vmem>>, vector<12x128xf32>,
    return
  }
  func.func @transform_0(%arg0: i32) -> (i32, i32) {
    %c0_i32 = arith.constant 0 : i32
    %c0_i32_0 = arith.constant 0 : i32
    %c0_i32_1 = arith.constant 0 : i32
    return %c0_i32, %c0_i32_0 : i32, i32
  }
  func.func @transform_1(%arg0: i32) -> (i32, i32) {
    %c0_i32 = arith.constant 0 : i32
    %c0_i32_0 = arith.constant 0 : i32
    %c0_i32_1 = arith.constant 0 : i32
    return %c0_i32, %c0_i32_0 : i32, i32
  }
  func.func @transform_2(%arg0: i32) -> (i32, i32, i32) {
    %c0_i32 = arith.constant 0 : i32
    %c0_i32_0 = arith.constant 0 : i32
    %c0_i32_1 = arith.constant 0 : i32
    %c0_i32_2 = arith.constant 0 : i32
    return %c0_i32, %c0_i32_0, %c0_i32_1 : i32, i32, i32
  }
  func.func @transform_3(%arg0: i32) -> (i32, i32) {
    %c0_i32 = arith.constant 0 : i32
    %c0_i32_0 = arith.constant 0 : i32
    %c0_i32_1 = arith.constant 0 : i32
    return %c0_i32, %c0_i32_0 : i32, i32
  }
  func.func @transform_4(%arg0: i32) -> (i32, i32) {
    %c0_i32 = arith.constant 0 : i32
    %c0_i32_0 = arith.constant 0 : i32
    %c0_i32_1 = arith.constant 0 : i32
    return %c0_i32, %c0_i32_0 : i32, i32
  }
  func.func @transform_5(%arg0: i32) -> (i32, i32) {
    %c0_i32 = arith.constant 0 : i32
    %c0_i32_0 = arith.constant 0 : i32
    %c0_i32_1 = arith.constant 0 : i32
    return %c0_i32, %c0_i32_0 : i32, i32
  }
  func.func @transform_6(%arg0: i32) -> (i32, i32) {
    %c0_i32 = arith.constant 0 : i32
    %c0_i32_0 = arith.constant 0 : i32
    %c0_i32_1 = arith.constant 0 : i32
    return %c0_i32, %c0_i32_0 : i32, i32
  }
  func.func @transform_7(%arg0: i32) -> (i32, i32) {
    %c0_i32 = arith.constant 0 : i32
    %c0_i32_0 = arith.constant 0 : i32
    %c0_i32_1 = arith.constant 0 : i32
    return %c0_i32, %c0_i32_0 : i32, i32
  }
}

</mosaic_0001>

<llo_original>
// kernel: tpu_custom_call.1
$region0: #{tpu_custom_call.1}
  #allocation0 [shape = 'u32[]', space=smem, size = 0x4, offset = 0x4, fixed_abs, tag = 'smem constant byte address 0x4 - core index']
  #allocation1 [shape = 'u32[144,128]{1,0:T(1,128)}', space=vmem, size = 0x12000, scoped, tag = 'internal scratch']
  %s0 = inlined_call_operand.hbm [shape: bf16[28,192], index: 0, kind: input, shape index: {}]
  %s1 = inlined_call_operand.hbm [shape: bf16[192,128], index: 1, kind: input, shape index: {}]
  %s2 = inlined_call_operand.hbm [shape: bf16[3,128,128], index: 2, kind: input, shape index: {}]
  %s3 = inlined_call_operand.hbm [shape: f32[128,128], index: 3, kind: input, shape index: {}]
  %s4 = inlined_call_operand.vmem [shape: f32[1,128], index: 4, kind: input, shape index: {}]
  %s5 = inlined_call_operand.vmem [shape: f32[1,128], index: 5, kind: input, shape index: {}]
  %s6 = inlined_call_operand.vmem [shape: f32[1,128], index: 6, kind: input, shape index: {}]
  %s7 = inlined_call_operand.hbm [shape: f32[24,128], index: 7, kind: output, shape index: {}]
  %s8 = sld [smem:[#allocation0]]
  $region54: #{tpu_custom_call.1} parent=0
    _
  %s10 = ssub.s32 1, %s8
  %s11 = scalar_select 0, %s10, %s8
  $region1: #{tpu_custom_call.1} parent=0
    #allocation2 [shape = 'u8[16384]{0}', space=vmem, size = 0x4000, scoped, tag = 'input window, operand 0, single buffered']
    #allocation3 [shape = 's32[1]{0}', space=sflag, size = 0x4, scoped, tag = 'scoped memory for tpu_custom_call.1']
    #allocation4 [shape = 's32[1]{0}', space=sflag, size = 0x4, scoped, tag = 'scoped memory for tpu_custom_call.1']
    #allocation5 [shape = 'u8[49152]{0}', space=vmem, size = 0xc000, scoped, tag = 'input window, operand 1, single buffered']
    #allocation6 [shape = 's32[1]{0}', space=sflag, size = 0x4, scoped, tag = 'scoped memory for tpu_custom_call.1']
    #allocation7 [shape = 'u8[98304]{0}', space=vmem, size = 0x18000, scoped, tag = 'input window, operand 2, single buffered']
    #allocation8 [shape = 'u8[65536]{0}', space=vmem, size = 0x10000, scoped, tag = 'input window, operand 3, single buffered']
    #allocation9 [shape = 's32[1]{0}', space=sflag, size = 0x4, scoped, tag = 'scoped memory for tpu_custom_call.1']
    #allocation10 [shape = 'u8[12288]{0}', space=vmem, size = 0x3000, scoped, tag = 'output window, operand 0, single buffered']
    %12 = vsyncpa [#allocation3], 0
    %13 = vsyncpa [#allocation6], 0
    %14 = vsyncpa [#allocation9], 0
    %15 = vsyncpa [#allocation4], 0
    // Predicated region
    $region2: #{tpu_custom_call.1} parent=1 // pred_check
      _
    $region3: #{tpu_custom_call.1} parent=1 // pred_check_branch
      %17 = sbr.rel (0) target = $region5
    $region4: #{tpu_custom_call.1} parent=1 // pred_region
      %s19 = ssub.s32 512, 512
      %20 = vsyncadd [#allocation3], %s19
      %s21 = sshll.u32 [#allocation2], 4
      %s22 = int_to_ptr.vmem [resolvable:$true] %s21
      %27 = dma.hbm_to_vmem [thread:$0]  %s0, 512, %s22, [#allocation3], 128, 128, 8
    $region5: #{tpu_custom_call.1} parent=1 // pred_fallthru
      _
    // Predicated region
    $region6: #{tpu_custom_call.1} parent=1 // pred_check
      _
    $region7: #{tpu_custom_call.1} parent=1 // pred_check_branch
      %29 = sbr.rel (0) target = $region9
    $region8: #{tpu_custom_call.1} parent=1 // pred_region
      %s31 = ssub.s32 1536, 1536
      %32 = vsyncadd [#allocation6], %s31
      %s33 = sshll.u32 [#allocation5], 4
      %s34 = int_to_ptr.vmem [resolvable:$true] %s33
      %39 = dma.hbm_to_vmem [thread:$0]  %s1, 1536, %s34, [#allocation6], 64, 64, 4
    $region9: #{tpu_custom_call.1} parent=1 // pred_fallthru
      _
    // Predicated region
    $region10: #{tpu_custom_call.1} parent=1 // pred_check
      _
    $region11: #{tpu_custom_call.1} parent=1 // pred_check_branch
      %41 = sbr.rel (0) target = $region13
    $region12: #{tpu_custom_call.1} parent=1 // pred_region
      %s43 = ssub.s32 3072, 3072
      %44 = vsyncadd [#allocation6], %s43
      %s45 = sshll.u32 [#allocation7], 4
      %s46 = int_to_ptr.vmem [resolvable:$true] %s45
      %51 = dma.hbm_to_vmem [thread:$0]  %s2, 3072, %s46, [#allocation6], 64, 64, 4
    $region13: #{tpu_custom_call.1} parent=1 // pred_fallthru
      _
    // Predicated region
    $region14: #{tpu_custom_call.1} parent=1 // pred_check
      _
    $region15: #{tpu_custom_call.1} parent=1 // pred_check_branch
      %53 = sbr.rel (0) target = $region17
    $region16: #{tpu_custom_call.1} parent=1 // pred_region
      %s55 = ssub.s32 2048, 2048
      %56 = vsyncadd [#allocation9], %s55
      %s57 = sshll.u32 [#allocation8], 4
      %s58 = int_to_ptr.vmem [resolvable:$true] %s57
      %63 = dma.hbm_to_vmem [thread:$0]  %s3, 2048, %s58, [#allocation9], 128, 128, 8
    $region17: #{tpu_custom_call.1} parent=1 // pred_fallthru
      _
    // Predicated region
    $region18: #{tpu_custom_call.1} parent=1 // pred_check
      _
    $region19: #{tpu_custom_call.1} parent=1 // pred_check_branch
      %65 = sbr.rel (0) target = $region21
    $region20: #{tpu_custom_call.1} parent=1 // pred_region
      _
    $region21: #{tpu_custom_call.1} parent=1 // pred_fallthru
      _
    // Predicated region
    $region22: #{tpu_custom_call.1} parent=1 // pred_check
      _
    $region23: #{tpu_custom_call.1} parent=1 // pred_check_branch
      %67 = sbr.rel (0) target = $region25
    $region24: #{tpu_custom_call.1} parent=1 // pred_region
      _
    $region25: #{tpu_custom_call.1} parent=1 // pred_fallthru
      _
    // Predicated region
    $region26: #{tpu_custom_call.1} parent=1 // pred_check
      _
    $region27: #{tpu_custom_call.1} parent=1 // pred_check_branch
      %69 = sbr.rel (0) target = $region29
    $region28: #{tpu_custom_call.1} parent=1 // pred_region
      _
    $region29: #{tpu_custom_call.1} parent=1 // pred_fallthru
      _
    // Predicated region
    $region30: #{tpu_custom_call.1} parent=1 // pred_check
      _
    $region31: #{tpu_custom_call.1} parent=1 // pred_check_branch
      %71 = sbr.rel (0) target = $region33
    $region32: #{tpu_custom_call.1} parent=1 // pred_region
      %72 = dma.done [#allocation3], 512
    $region33: #{tpu_custom_call.1} parent=1 // pred_fallthru
      _
    // Predicated region
    $region34: #{tpu_custom_call.1} parent=1 // pred_check
      _
    $region35: #{tpu_custom_call.1} parent=1 // pred_check_branch
      %74 = sbr.rel (0) target = $region37
    $region36: #{tpu_custom_call.1} parent=1 // pred_region
      %75 = dma.done [#allocation6], 1536
    $region37: #{tpu_custom_call.1} parent=1 // pred_fallthru
      _
    // Predicated region
    $region38: #{tpu_custom_call.1} parent=1 // pred_check
      _
    $region39: #{tpu_custom_call.1} parent=1 // pred_check_branch
      %77 = sbr.rel (0) target = $region41
    $region40: #{tpu_custom_call.1} parent=1 // pred_region
      %78 = dma.done [#allocation6], 3072
    $region41: #{tpu_custom_call.1} parent=1 // pred_fallthru
      _
    // Predicated region
    $region42: #{tpu_custom_call.1} parent=1 // pred_check
      _
    $region43: #{tpu_custom_call.1} parent=1 // pred_check_branch
      %80 = sbr.rel (0) target = $region45
    $region44: #{tpu_custom_call.1} parent=1 // pred_region
      %81 = dma.done [#allocation9], 2048
    $region45: #{tpu_custom_call.1} parent=1 // pred_fallthru
      _
    %v83 = vld [vmem:[#allocation2] sm:$0xff]
    %v84 = vld [vmem:[#allocation2 + $0x8] sm:$0xff]
    %v85 = vld [vmem:[#allocation2 + $0x10] sm:$0xff]
    %v86 = vld [vmem:[#allocation2 + $0x18] sm:$0x33]
    %v87 = vld [vmem:[#allocation5] sm:$0xf]
    %v88 = vld [vmem:[#allocation5 + $0x4] sm:$0xf]
    %v89 = vld [vmem:[#allocation5 + $0x8] sm:$0xf]
    %v90 = vld [vmem:[#allocation5 + $0xc] sm:$0xf]
    %v91 = vld [vmem:[#allocation5 + $0x10] sm:$0xf]
    %v92 = vld [vmem:[#allocation5 + $0x14] sm:$0xf]
    %v93 = vld [vmem:[#allocation5 + $0x18] sm:$0xf]
    %v94 = vld [vmem:[#allocation5 + $0x1c] sm:$0xf]
    %v95 = vld [vmem:[#allocation5 + $0x20] sm:$0xf]
    %v96 = vld [vmem:[#allocation5 + $0x24] sm:$0xf]
    %v97 = vld [vmem:[#allocation5 + $0x28] sm:$0xf]
    %v98 = vld [vmem:[#allocation5 + $0x2c] sm:$0xf]
    %v99 = vld [vmem:[#allocation5 + $0x30] sm:$0xf]
    %v100 = vld [vmem:[#allocation5 + $0x34] sm:$0xf]
    %v101 = vld [vmem:[#allocation5 + $0x38] sm:$0xf]
    %v102 = vld [vmem:[#allocation5 + $0x3c] sm:$0xf]
    %v103 = vld [vmem:[#allocation5 + $0x40] sm:$0xf]
    %v104 = vld [vmem:[#allocation5 + $0x44] sm:$0xf]
    %v105 = vld [vmem:[#allocation5 + $0x48] sm:$0xf]
    %v106 = vld [vmem:[#allocation5 + $0x4c] sm:$0xf]
    %v107 = vld [vmem:[#allocation5 + $0x50] sm:$0xf]
    %v108 = vld [vmem:[#allocation5 + $0x54] sm:$0xf]
    %v109 = vld [vmem:[#allocation5 + $0x58] sm:$0xf]
    %v110 = vld [vmem:[#allocation5 + $0x5c] sm:$0xf]
    %v115 = vunpack.c.l.b16 %v83
    %v116 = vunpack.c.h.b16 %v83
    %v117 = vunpack.c.l.b16 %v84
    %v118 = vunpack.c.h.b16 %v84
    %v119 = vunpack.c.l.b16 %v85
    %v120 = vunpack.c.h.b16 %v85
    %v121 = vunpack.c.l.b16 %v86
    %v122 = vunpack.c.h.b16 %v86
    %v123 = vpack.c.b16 %v117, %v115
    %v124 = vpack.c.b16 %v118, %v116
    %v125 = vpack.c.b16 %v121, %v119
    %v126 = vpack.c.b16 %v122, %v120
    %v153 = vunpack.c.l.b16 %v87
    %v154 = vunpack.c.l.b16 %v88
    %v155 = vunpack.c.l.b16 %v89
    %v156 = vunpack.c.l.b16 %v90
    %v157 = vunpack.c.l.b16 %v91
    %v158 = vunpack.c.l.b16 %v92
    %v159 = vunpack.c.l.b16 %v93
    %v160 = vunpack.c.l.b16 %v94
    %v161 = vunpack.c.l.b16 %v95
    %v162 = vunpack.c.l.b16 %v96
    %v163 = vunpack.c.l.b16 %v97
    %v164 = vunpack.c.l.b16 %v98
    %v165 = vunpack.c.l.b16 %v99
    %v166 = vunpack.c.l.b16 %v100
    %v167 = vunpack.c.l.b16 %v101
    %v168 = vunpack.c.l.b16 %v102
    %v169 = vunpack.c.l.b16 %v103
    %v170 = vunpack.c.l.b16 %v104
    %v171 = vunpack.c.l.b16 %v105
    %v172 = vunpack.c.l.b16 %v106
    %v173 = vunpack.c.l.b16 %v107
    %v174 = vunpack.c.l.b16 %v108
    %v175 = vunpack.c.l.b16 %v109
    %v176 = vunpack.c.l.b16 %v110
    %v177 = vpack.c.b16 %v154, %v153
    %v178 = vpack.c.b16 %v156, %v155
    %v179 = vpack.c.b16 %v158, %v157
    %v180 = vpack.c.b16 %v160, %v159
    %v181 = vpack.c.b16 %v162, %v161
    %v182 = vpack.c.b16 %v164, %v163
    %v183 = vpack.c.b16 %v166, %v165
    %v184 = vpack.c.b16 %v168, %v167
    %v185 = vpack.c.b16 %v170, %v169
    %v186 = vpack.c.b16 %v172, %v171
    %v187 = vpack.c.b16 %v174, %v173
    %v188 = vpack.c.b16 %v176, %v175
    %vm201 = vcmask 523264
    %v203 = vsel %vm201, %v124, 0
    %v206 = vsel %vm201, %v126, 0
    %208 = vmatprep.subr.bf16.mxu0 0
    %209 = vmatpush1.bf16.msra.mxu0 %v184
    %210 = vmatprep.subr.bf16.mxu0 0
    %211 = vmatpush1.bf16.msra.mxu0 %v183
    %212 = vmatprep.subr.bf16.mxu0 0
    %213 = vmatpush1.bf16.msra.mxu0 %v182
    %214 = vmatprep.subr.bf16.mxu0 0
    %215 = vmatpush1.bf16.msra.mxu0 %v181
    %216 = vmatprep.subr.bf16.mxu0 0
    %217 = vmatpush1.bf16.msra.mxu0 %v180
    %218 = vmatprep.subr.bf16.mxu0 0
    %219 = vmatpush1.bf16.msra.mxu0 %v179
    %220 = vmatprep.subr.bf16.mxu0 0
    %221 = vmatpush1.bf16.msra.mxu0 %v178
    %222 = vmatprep.subr.bf16.mxu0 0
    %223 = vmatpush1.bf16.msra.mxu0 %v177
    %224 = vmatprep.subr.bf16.mxu0 0
    %225 = vmatpush2.bf16.msra.mxu0 0
    %226 = vmatprep.subr.bf16.mxu0 0
    %227 = vmatpush2.bf16.msra.mxu0 0
    %228 = vmatprep.subr.bf16.mxu0 0
    %229 = vmatpush2.bf16.msra.mxu0 0
    %230 = vmatprep.subr.bf16.mxu0 0
    %231 = vmatpush2.bf16.msra.mxu0 0
    %232 = vmatprep.subr.bf16.mxu0 0
    %233 = vmatpush2.bf16.msra.mxu0 %v188
    %234 = vmatprep.subr.bf16.mxu0 0
    %235 = vmatpush2.bf16.msra.mxu0 %v187
    %236 = vmatprep.subr.bf16.mxu0 0
    %237 = vmatpush2.bf16.msra.mxu0 %v186
    %238 = vmatprep.subr.bf16.mxu0 0
    %239 = vmatpush2.bf16.msra.mxu0 %v185
    %240 = vmatprep.mubr.bf16.mxu0 %v203
    %241 = vmatmul.mubr.bf16.gmra.mxu0 %v123
    %v242 = vpop.f32.mrf.mxu0
    %v243 = vadd.f32 0.0, %v242
    %v244 = vpop.f32.mrf.mxu0
    %v245 = vpop.f32.mrf.mxu0
    %v246 = vadd.f32 0.0, %v245
    %v247 = vpop.f32.mrf.mxu0
    %248 = vmatprep.mubr.bf16.mxu0 %v206
    %249 = vmatmul.mubr.bf16.gmra.mxu0 %v125
    %v250 = vpop.f32.mrf.mxu0
    %v251 = vadd.f32 0.0, %v250
    %v252 = vpop.f32.mrf.mxu0
    %v253 = vpop.f32.mrf.mxu0
    %v254 = vadd.f32 0.0, %v253
    %v255 = vpop.f32.mrf.mxu0
    %256 = vdwg.mxu0
    %v257 = vadd.f32 %v243, %v246
    %v258 = vadd.f32 %v257, %v251
    %vm259 = vcmask 1043456
    %v260 = vsel %vm259, %v254, 0.0
    %v261 = vadd.f32 %v258, %v260
    %v262 = vrot.slane %v261, 4
    %v263 = vadd.f32 %v261, %v262
    %v264 = vrot.slane %v263, 2
    %v265 = vadd.f32 %v263, %v264
    %v266 = vrot.slane %v265, 1
    %v267 = vadd.f32 %v265, %v266
    %v268 = vmul.f32 %v243, %v243
    %v269 = vmul.f32 %v246, %v246
    %v270 = vmul.f32 %v251, %v251
    %v271 = vmul.f32 %v254, %v254
    %v272 = vadd.f32 %v268, %v269
    %v273 = vadd.f32 %v272, %v270
    %v274 = vsel %vm259, %v271, 0.0
    %v275 = vadd.f32 %v273, %v274
    %v276 = vrot.slane %v275, 4
    %v277 = vadd.f32 %v275, %v276
    %v278 = vrot.slane %v277, 2
    %v279 = vadd.f32 %v277, %v278
    %v280 = vrot.slane %v279, 1
    %v281 = vadd.f32 %v279, %v280
    %v282 = vld [vmem:[#allocation8] sm:$0xff]
    %v283 = vld [vmem:[#allocation8 + $0x8] sm:$0xff]
    %v284 = vld [vmem:[#allocation8 + $0x10] sm:$0xff]
    %v285 = vld [vmem:[#allocation8 + $0x18] sm:$0xff]
    %v286 = vld [vmem:[#allocation8 + $0x20] sm:$0xff]
    %v287 = vld [vmem:[#allocation8 + $0x28] sm:$0xff]
    %v288 = vld [vmem:[#allocation8 + $0x30] sm:$0xff]
    %v289 = vld [vmem:[#allocation8 + $0x38] sm:$0xff]
    %v290 = vld [vmem:[#allocation8 + $0x40] sm:$0xff]
    %v291 = vld [vmem:[#allocation8 + $0x48] sm:$0xff]
    %v292 = vld [vmem:[#allocation8 + $0x50] sm:$0xff]
    %v293 = vld [vmem:[#allocation8 + $0x58] sm:$0xff]
    %v294 = vld [vmem:[#allocation8 + $0x60] sm:$0xff]
    %v295 = vld [vmem:[#allocation8 + $0x68] sm:$0xff]
    %v296 = vld [vmem:[#allocation8 + $0x70] sm:$0xff]
    %v297 = vld [vmem:[#allocation8 + $0x78] sm:$0xff]
    %298 = vmatprep.subr.mxu0 0.0
    %299 = vmatpush1.msra.mxu0 %v297
    %300 = vmatprep.subr.mxu0 0.0
    %301 = vmatpush1.msra.mxu0 %v296
    %302 = vmatprep.subr.mxu0 0.0
    %303 = vmatpush1.msra.mxu0 %v295
    %304 = vmatprep.subr.mxu0 0.0
    %305 = vmatpush1.msra.mxu0 %v294
    %306 = vmatprep.subr.mxu0 0.0
    %307 = vmatpush1.msra.mxu0 %v293
    %308 = vmatprep.subr.mxu0 0.0
    %309 = vmatpush1.msra.mxu0 %v292
    %310 = vmatprep.subr.mxu0 0.0
    %311 = vmatpush1.msra.mxu0 %v291
    %312 = vmatprep.subr.mxu0 0.0
    %313 = vmatpush1.msra.mxu0 %v290
    %314 = vmatprep.subr.mxu0 0.0
    %315 = vmatpush1.msra.mxu0 %v289
    %316 = vmatprep.subr.mxu0 0.0
    %317 = vmatpush1.msra.mxu0 %v288
    %318 = vmatprep.subr.mxu0 0.0
    %319 = vmatpush1.msra.mxu0 %v287
    %320 = vmatprep.subr.mxu0 0.0
    %321 = vmatpush1.msra.mxu0 %v286
    %322 = vmatprep.subr.mxu0 0.0
    %323 = vmatpush1.msra.mxu0 %v285
    %324 = vmatprep.subr.mxu0 0.0
    %325 = vmatpush1.msra.mxu0 %v284
    %326 = vmatprep.subr.mxu0 0.0
    %327 = vmatpush1.msra.mxu0 %v283
    %328 = vmatprep.subr.mxu0 0.0
    %329 = vmatpush1.msra.mxu0 %v282
    %330 = vmatprep.subr.mxu0 0.0
    %331 = vmatpush2.msra.mxu0 0.0
    %332 = vmatprep.subr.mxu0 0.0
    %333 = vmatpush2.msra.mxu0 0.0
    %334 = vmatprep.subr.mxu0 0.0
    %335 = vmatpush2.msra.mxu0 0.0
    %336 = vmatprep.subr.mxu0 0.0
    %337 = vmatpush2.msra.mxu0 0.0
    %338 = vmatprep.subr.mxu0 0.0
    %339 = vmatpush2.msra.mxu0 0.0
    %340 = vmatprep.subr.mxu0 0.0
    %341 = vmatpush2.msra.mxu0 0.0
    %342 = vmatprep.subr.mxu0 0.0
    %343 = vmatpush2.msra.mxu0 0.0
    %344 = vmatprep.subr.mxu0 0.0
    %345 = vmatpush2.msra.mxu0 0.0
    %346 = vmatprep.subr.mxu0 0.0
    %347 = vmatpush2.msra.mxu0 0.0
    %348 = vmatprep.subr.mxu0 0.0
    %349 = vmatpush2.msra.mxu0 0.0
    %350 = vmatprep.subr.mxu0 0.0
    %351 = vmatpush2.msra.mxu0 0.0
    %352 = vmatprep.subr.mxu0 0.0
    %353 = vmatpush2.msra.mxu0 0.0
    %354 = vmatprep.subr.mxu0 0.0
    %355 = vmatpush2.msra.mxu0 0.0
    %356 = vmatprep.subr.mxu0 0.0
    %357 = vmatpush2.msra.mxu0 0.0
    %358 = vmatprep.subr.mxu0 0.0
    %359 = vmatpush2.msra.mxu0 0.0
    %360 = vmatprep.subr.mxu0 0.0
    %361 = vmatpush2.msra.mxu0 0.0
    %362 = vmatprep.mubr.f32.mxu0 0.0
    %363 = vmatmul.mubr.f32.gmra.mxu0 %v267
    %v364 = vpop.f32.mrf.mxu0
    %v365 = vadd.f32 0.0, %v364
    %v366 = vpop.f32.mrf.mxu0
    %367 = vdwg.mxu0
    %368 = vmatprep.subr.mxu0 0.0
    %369 = vmatpush1.msra.mxu0 %v297
    %370 = vmatprep.subr.mxu0 0.0
    %371 = vmatpush1.msra.mxu0 %v296
    %372 = vmatprep.subr.mxu0 0.0
    %373 = vmatpush1.msra.mxu0 %v295
    %374 = vmatprep.subr.mxu0 0.0
    %375 = vmatpush1.msra.mxu0 %v294
    %376 = vmatprep.subr.mxu0 0.0
    %377 = vmatpush1.msra.mxu0 %v293
    %378 = vmatprep.subr.mxu0 0.0
    %379 = vmatpush1.msra.mxu0 %v292
    %380 = vmatprep.subr.mxu0 0.0
    %381 = vmatpush1.msra.mxu0 %v291
    %382 = vmatprep.subr.mxu0 0.0
    %383 = vmatpush1.msra.mxu0 %v290
    %384 = vmatprep.subr.mxu0 0.0
    %385 = vmatpush1.msra.mxu0 %v289
    %386 = vmatprep.subr.mxu0 0.0
    %387 = vmatpush1.msra.mxu0 %v288
    %388 = vmatprep.subr.mxu0 0.0
    %389 = vmatpush1.msra.mxu0 %v287
    %390 = vmatprep.subr.mxu0 0.0
    %391 = vmatpush1.msra.mxu0 %v286
    %392 = vmatprep.subr.mxu0 0.0
    %393 = vmatpush1.msra.mxu0 %v285
    %394 = vmatprep.subr.mxu0 0.0
    %395 = vmatpush1.msra.mxu0 %v284
    %396 = vmatprep.subr.mxu0 0.0
    %397 = vmatpush1.msra.mxu0 %v283
    %398 = vmatprep.subr.mxu0 0.0
    %399 = vmatpush1.msra.mxu0 %v282
    %400 = vmatprep.subr.mxu0 0.0
    %401 = vmatpush2.msra.mxu0 0.0
    %402 = vmatprep.subr.mxu0 0.0
    %403 = vmatpush2.msra.mxu0 0.0
    %404 = vmatprep.subr.mxu0 0.0
    %405 = vmatpush2.msra.mxu0 0.0
    %406 = vmatprep.subr.mxu0 0.0
    %407 = vmatpush2.msra.mxu0 0.0
    %408 = vmatprep.subr.mxu0 0.0
    %409 = vmatpush2.msra.mxu0 0.0
    %410 = vmatprep.subr.mxu0 0.0
    %411 = vmatpush2.msra.mxu0 0.0
    %412 = vmatprep.subr.mxu0 0.0
    %413 = vmatpush2.msra.mxu0 0.0
    %414 = vmatprep.subr.mxu0 0.0
    %415 = vmatpush2.msra.mxu0 0.0
    %416 = vmatprep.subr.mxu0 0.0
    %417 = vmatpush2.msra.mxu0 0.0
    %418 = vmatprep.subr.mxu0 0.0
    %419 = vmatpush2.msra.mxu0 0.0
    %420 = vmatprep.subr.mxu0 0.0
    %421 = vmatpush2.msra.mxu0 0.0
    %422 = vmatprep.subr.mxu0 0.0
    %423 = vmatpush2.msra.mxu0 0.0
    %424 = vmatprep.subr.mxu0 0.0
    %425 = vmatpush2.msra.mxu0 0.0
    %426 = vmatprep.subr.mxu0 0.0
    %427 = vmatpush2.msra.mxu0 0.0
    %428 = vmatprep.subr.mxu0 0.0
    %429 = vmatpush2.msra.mxu0 0.0
    %430 = vmatprep.subr.mxu0 0.0
    %431 = vmatpush2.msra.mxu0 0.0
    %432 = vmatprep.mubr.f32.mxu0 0.0
    %433 = vmatmul.mubr.f32.gmra.mxu0 %v281
    %v434 = vpop.f32.mrf.mxu0
    %v435 = vadd.f32 0.0, %v434
    %v436 = vpop.f32.mrf.mxu0
    %437 = vdwg.mxu0
    %v438 = vmul.f32 %v365, %v365
    %v439 = vsub.f32 %v435, %v438
    %v440 = vld [vmem:[%s4] sm:$0x1]
    %v441 = vadd.f32 %v439, 1e-05
    %v442 = vrsqrt.pop %v441
    %v443 = vmul.f32 %v440, %v442
    %v444 = vld [vmem:[%s5] sm:$0x1]
    %v445 = vmul.f32 %v365, %v443
    %v446 = vsub.f32 %v444, %v445
    %v448 = vlaneseq
    %v449 = vshrl.u32 %v448, 7
    %v450 = vsub.s32 0, %v449
    %v451 = vrot.slane %v443, %v450
    %v453 = vmul.f32 %v243, %v451
    %v454 = vmul.f32 %v246, %v451
    %v455 = vmul.f32 %v251, %v451
    %v456 = vmul.f32 %v254, %v451
    %v458 = vlaneseq
    %v459 = vshrl.u32 %v458, 7
    %v460 = vsub.s32 0, %v459
    %v461 = vrot.slane %v446, %v460
    %v463 = vadd.f32 %v453, %v461
    %v464 = vadd.f32 %v454, %v461
    %v465 = vadd.f32 %v455, %v461
    %v466 = vadd.f32 %v456, %v461
    %v467 = vmax.f32 %v463, 0.0
    %v468 = vmax.f32 %v464, 0.0
    %v469 = vmax.f32 %v465, 0.0
    %v470 = vmax.f32 %v466, 0.0
    %v471 = vpack.c.bf16 %v468, %v467
    %v472 = vpack.c.bf16 %v470, %v469
    %v473 = vld [vmem:[#allocation7] sm:$0xf]
    %v474 = vld [vmem:[#allocation7 + $0x4] sm:$0xf]
    %v475 = vld [vmem:[#allocation7 + $0x8] sm:$0xf]
    %v476 = vld [vmem:[#allocation7 + $0xc] sm:$0xf]
    %v477 = vld [vmem:[#allocation7 + $0x10] sm:$0xf]
    %v478 = vld [vmem:[#allocation7 + $0x14] sm:$0xf]
    %v479 = vld [vmem:[#allocation7 + $0x18] sm:$0xf]
    %v480 = vld [vmem:[#allocation7 + $0x1c] sm:$0xf]
    %v481 = vld [vmem:[#allocation7 + $0x20] sm:$0xf]
    %v482 = vld [vmem:[#allocation7 + $0x24] sm:$0xf]
    %v483 = vld [vmem:[#allocation7 + $0x28] sm:$0xf]
    %v484 = vld [vmem:[#allocation7 + $0x2c] sm:$0xf]
    %v485 = vld [vmem:[#allocation7 + $0x30] sm:$0xf]
    %v486 = vld [vmem:[#allocation7 + $0x34] sm:$0xf]
    %v487 = vld [vmem:[#allocation7 + $0x38] sm:$0xf]
    %v488 = vld [vmem:[#allocation7 + $0x3c] sm:$0xf]
    %s489 = scalar_lea.vmem [#allocation7], 64
    %v490 = vld [vmem:[%s489] sm:$0xf]
    %v491 = vld [vmem:[%s489 + $0x4] sm:$0xf]
    %v492 = vld [vmem:[%s489 + $0x8] sm:$0xf]
    %v493 = vld [vmem:[%s489 + $0xc] sm:$0xf]
    %v494 = vld [vmem:[%s489 + $0x10] sm:$0xf]
    %v495 = vld [vmem:[%s489 + $0x14] sm:$0xf]
    %v496 = vld [vmem:[%s489 + $0x18] sm:$0xf]
    %v497 = vld [vmem:[%s489 + $0x1c] sm:$0xf]
    %v498 = vld [vmem:[%s489 + $0x20] sm:$0xf]
    %v499 = vld [vmem:[%s489 + $0x24] sm:$0xf]
    %v500 = vld [vmem:[%s489 + $0x28] sm:$0xf]
    %v501 = vld [vmem:[%s489 + $0x2c] sm:$0xf]
    %v502 = vld [vmem:[%s489 + $0x30] sm:$0xf]
    %v503 = vld [vmem:[%s489 + $0x34] sm:$0xf]
    %v504 = vld [vmem:[%s489 + $0x38] sm:$0xf]
    %v505 = vld [vmem:[%s489 + $0x3c] sm:$0xf]
    %v507 = vshrl.u32 %v471, 16
    %v509 = vshll.u32 %v471, 16
    %v511 = vrot.slane %v509, 1
    %v512 = vor.u32 %v507, %v511
    %v530 = vunpack.c.l.b16 %v490
    %v531 = vunpack.c.l.b16 %v491
    %v532 = vunpack.c.l.b16 %v492
    %v533 = vunpack.c.l.b16 %v493
    %v534 = vunpack.c.l.b16 %v494
    %v535 = vunpack.c.l.b16 %v495
    %v536 = vunpack.c.l.b16 %v496
    %v537 = vunpack.c.l.b16 %v497
    %v538 = vunpack.c.l.b16 %v498
    %v539 = vunpack.c.l.b16 %v499
    %v540 = vunpack.c.l.b16 %v500
    %v541 = vunpack.c.l.b16 %v501
    %v542 = vunpack.c.l.b16 %v502
    %v543 = vunpack.c.l.b16 %v503
    %v544 = vunpack.c.l.b16 %v504
    %v545 = vunpack.c.l.b16 %v505
    %v546 = vpack.c.b16 %v531, %v530
    %v547 = vpack.c.b16 %v533, %v532
    %v548 = vpack.c.b16 %v535, %v534
    %v549 = vpack.c.b16 %v537, %v536
    %v550 = vpack.c.b16 %v539, %v538
    %v551 = vpack.c.b16 %v541, %v540
    %v552 = vpack.c.b16 %v543, %v542
    %v553 = vpack.c.b16 %v545, %v544
    %562 = vmatprep.subr.bf16.mxu0 0
    %563 = vmatpush1.bf16.msra.mxu0 %v553
    %564 = vmatprep.subr.bf16.mxu0 0
    %565 = vmatpush1.bf16.msra.mxu0 %v552
    %566 = vmatprep.subr.bf16.mxu0 0
    %567 = vmatpush1.bf16.msra.mxu0 %v551
    %568 = vmatprep.subr.bf16.mxu0 0
    %569 = vmatpush1.bf16.msra.mxu0 %v550
    %570 = vmatprep.subr.bf16.mxu0 0
    %571 = vmatpush1.bf16.msra.mxu0 %v549
    %572 = vmatprep.subr.bf16.mxu0 0
    %573 = vmatpush1.bf16.msra.mxu0 %v548
    %574 = vmatprep.subr.bf16.mxu0 0
    %575 = vmatpush1.bf16.msra.mxu0 %v547
    %576 = vmatprep.subr.bf16.mxu0 0
    %577 = vmatpush1.bf16.msra.mxu0 %v546
    %578 = vmatprep.subr.bf16.mxu0 0
    %579 = vmatpush2.bf16.msra.mxu0 0
    %580 = vmatprep.subr.bf16.mxu0 0
    %581 = vmatpush2.bf16.msra.mxu0 0
    %582 = vmatprep.subr.bf16.mxu0 0
    %583 = vmatpush2.bf16.msra.mxu0 0
    %584 = vmatprep.subr.bf16.mxu0 0
    %585 = vmatpush2.bf16.msra.mxu0 0
    %586 = vmatprep.subr.bf16.mxu0 0
    %587 = vmatpush2.bf16.msra.mxu0 0
    %588 = vmatprep.subr.bf16.mxu0 0
    %589 = vmatpush2.bf16.msra.mxu0 0
    %590 = vmatprep.subr.bf16.mxu0 0
    %591 = vmatpush2.bf16.msra.mxu0 0
    %592 = vmatprep.subr.bf16.mxu0 0
    %593 = vmatpush2.bf16.msra.mxu0 0
    %594 = vmatprep.mubr.bf16.mxu0 0
    %595 = vmatmul.mubr.bf16.gmra.mxu0 %v512
    %v596 = vpop.f32.mrf.mxu0
    %v597 = vadd.f32 0.0, %v596
    %v598 = vpop.f32.mrf.mxu0
    %v599 = vpop.f32.mrf.mxu0
    %v600 = vadd.f32 0.0, %v599
    %v601 = vpop.f32.mrf.mxu0
    %602 = vdwg.mxu0
    %v619 = vunpack.c.l.b16 %v473
    %v620 = vunpack.c.l.b16 %v474
    %v621 = vunpack.c.l.b16 %v475
    %v622 = vunpack.c.l.b16 %v476
    %v623 = vunpack.c.l.b16 %v477
    %v624 = vunpack.c.l.b16 %v478
    %v625 = vunpack.c.l.b16 %v479
    %v626 = vunpack.c.l.b16 %v480
    %v627 = vunpack.c.l.b16 %v481
    %v628 = vunpack.c.l.b16 %v482
    %v629 = vunpack.c.l.b16 %v483
    %v630 = vunpack.c.l.b16 %v484
    %v631 = vunpack.c.l.b16 %v485
    %v632 = vunpack.c.l.b16 %v486
    %v633 = vunpack.c.l.b16 %v487
    %v634 = vunpack.c.l.b16 %v488
    %v635 = vpack.c.b16 %v620, %v619
    %v636 = vpack.c.b16 %v622, %v621
    %v637 = vpack.c.b16 %v624, %v623
    %v638 = vpack.c.b16 %v626, %v625
    %v639 = vpack.c.b16 %v628, %v627
    %v640 = vpack.c.b16 %v630, %v629
    %v641 = vpack.c.b16 %v632, %v631
    %v642 = vpack.c.b16 %v634, %v633
    %651 = vmatprep.subr.bf16.mxu0 0
    %652 = vmatpush1.bf16.msra.mxu0 %v642
    %653 = vmatprep.subr.bf16.mxu0 0
    %654 = vmatpush1.bf16.msra.mxu0 %v641
    %655 = vmatprep.subr.bf16.mxu0 0
    %656 = vmatpush1.bf16.msra.mxu0 %v640
    %657 = vmatprep.subr.bf16.mxu0 0
    %658 = vmatpush1.bf16.msra.mxu0 %v639
    %659 = vmatprep.subr.bf16.mxu0 0
    %660 = vmatpush1.bf16.msra.mxu0 %v638
    %661 = vmatprep.subr.bf16.mxu0 0
    %662 = vmatpush1.bf16.msra.mxu0 %v637
    %663 = vmatprep.subr.bf16.mxu0 0
    %664 = vmatpush1.bf16.msra.mxu0 %v636
    %665 = vmatprep.subr.bf16.mxu0 0
    %666 = vmatpush1.bf16.msra.mxu0 %v635
    %667 = vmatprep.subr.bf16.mxu0 0
    %668 = vmatpush2.bf16.msra.mxu0 0
    %669 = vmatprep.subr.bf16.mxu0 0
    %670 = vmatpush2.bf16.msra.mxu0 0
    %671 = vmatprep.subr.bf16.mxu0 0
    %672 = vmatpush2.bf16.msra.mxu0 0
    %673 = vmatprep.subr.bf16.mxu0 0
    %674 = vmatpush2.bf16.msra.mxu0 0
    %675 = vmatprep.subr.bf16.mxu0 0
    %676 = vmatpush2.bf16.msra.mxu0 0
    %677 = vmatprep.subr.bf16.mxu0 0
    %678 = vmatpush2.bf16.msra.mxu0 0
    %679 = vmatprep.subr.bf16.mxu0 0
    %680 = vmatpush2.bf16.msra.mxu0 0
    %681 = vmatprep.subr.bf16.mxu0 0
    %682 = vmatpush2.bf16.msra.mxu0 0
    %683 = vmatprep.mubr.bf16.mxu0 0
    %684 = vmatmul.mubr.bf16.gmra.mxu0 %v471
    %v685 = vpop.f32.mrf.mxu0
    %v686 = vadd.f32 %v597, %v685
    %v687 = vpop.f32.mrf.mxu0
    %v688 = vpop.f32.mrf.mxu0
    %v689 = vadd.f32 %v600, %v688
    %v690 = vpop.f32.mrf.mxu0
    %691 = vdwg.mxu0
    %s692 = scalar_lea.vmem [#allocation7], 128
    %v693 = vld [vmem:[%s692] sm:$0xf]
    %v694 = vld [vmem:[%s692 + $0x4] sm:$0xf]
    %v695 = vld [vmem:[%s692 + $0x8] sm:$0xf]
    %v696 = vld [vmem:[%s692 + $0xc] sm:$0xf]
    %v697 = vld [vmem:[%s692 + $0x10] sm:$0xf]
    %v698 = vld [vmem:[%s692 + $0x14] sm:$0xf]
    %v699 = vld [vmem:[%s692 + $0x18] sm:$0xf]
    %v700 = vld [vmem:[%s692 + $0x1c] sm:$0xf]
    %v701 = vld [vmem:[%s692 + $0x20] sm:$0xf]
    %v702 = vld [vmem:[%s692 + $0x24] sm:$0xf]
    %v703 = vld [vmem:[%s692 + $0x28] sm:$0xf]
    %v704 = vld [vmem:[%s692 + $0x2c] sm:$0xf]
    %v705 = vld [vmem:[%s692 + $0x30] sm:$0xf]
    %v706 = vld [vmem:[%s692 + $0x34] sm:$0xf]
    %v707 = vld [vmem:[%s692 + $0x38] sm:$0xf]
    %v708 = vld [vmem:[%s692 + $0x3c] sm:$0xf]
    %v710 = vrot.slane %v471, 1
    %v728 = vunpack.c.l.b16 %v693
    %v729 = vunpack.c.l.b16 %v694
    %v730 = vunpack.c.l.b16 %v695
    %v731 = vunpack.c.l.b16 %v696
    %v732 = vunpack.c.l.b16 %v697
    %v733 = vunpack.c.l.b16 %v698
    %v734 = vunpack.c.l.b16 %v699
    %v735 = vunpack.c.l.b16 %v700
    %v736 = vunpack.c.l.b16 %v701
    %v737 = vunpack.c.l.b16 %v702
    %v738 = vunpack.c.l.b16 %v703
    %v739 = vunpack.c.l.b16 %v704
    %v740 = vunpack.c.l.b16 %v705
    %v741 = vunpack.c.l.b16 %v706
    %v742 = vunpack.c.l.b16 %v707
    %v743 = vunpack.c.l.b16 %v708
    %v744 = vpack.c.b16 %v729, %v728
    %v745 = vpack.c.b16 %v731, %v730
    %v746 = vpack.c.b16 %v733, %v732
    %v747 = vpack.c.b16 %v735, %v734
    %v748 = vpack.c.b16 %v737, %v736
    %v749 = vpack.c.b16 %v739, %v738
    %v750 = vpack.c.b16 %v741, %v740
    %v751 = vpack.c.b16 %v743, %v742
    %760 = vmatprep.subr.bf16.mxu0 0
    %761 = vmatpush1.bf16.msra.mxu0 %v751
    %762 = vmatprep.subr.bf16.mxu0 0
    %763 = vmatpush1.bf16.msra.mxu0 %v750
    %764 = vmatprep.subr.bf16.mxu0 0
    %765 = vmatpush1.bf16.msra.mxu0 %v749
    %766 = vmatprep.subr.bf16.mxu0 0
    %767 = vmatpush1.bf16.msra.mxu0 %v748
    %768 = vmatprep.subr.bf16.mxu0 0
    %769 = vmatpush1.bf16.msra.mxu0 %v747
    %770 = vmatprep.subr.bf16.mxu0 0
    %771 = vmatpush1.bf16.msra.mxu0 %v746
    %772 = vmatprep.subr.bf16.mxu0 0
    %773 = vmatpush1.bf16.msra.mxu0 %v745
    %774 = vmatprep.subr.bf16.mxu0 0
    %775 = vmatpush1.bf16.msra.mxu0 %v744
    %776 = vmatprep.subr.bf16.mxu0 0
    %777 = vmatpush2.bf16.msra.mxu0 0
    %778 = vmatprep.subr.bf16.mxu0 0
    %779 = vmatpush2.bf16.msra.mxu0 0
    %780 = vmatprep.subr.bf16.mxu0 0
    %781 = vmatpush2.bf16.msra.mxu0 0
    %782 = vmatprep.subr.bf16.mxu0 0
    %783 = vmatpush2.bf16.msra.mxu0 0
    %784 = vmatprep.subr.bf16.mxu0 0
    %785 = vmatpush2.bf16.msra.mxu0 0
    %786 = vmatprep.subr.bf16.mxu0 0
    %787 = vmatpush2.bf16.msra.mxu0 0
    %788 = vmatprep.subr.bf16.mxu0 0
    %789 = vmatpush2.bf16.msra.mxu0 0
    %790 = vmatprep.subr.bf16.mxu0 0
    %791 = vmatpush2.bf16.msra.mxu0 0
    %792 = vmatprep.mubr.bf16.mxu0 0
    %793 = vmatmul.mubr.bf16.gmra.mxu0 %v710
    %v794 = vpop.f32.mrf.mxu0
    %v795 = vadd.f32 0.0, %v794
    %v796 = vpop.f32.mrf.mxu0
    %v797 = vpop.f32.mrf.mxu0
    %v798 = vadd.f32 0.0, %v797
    %v799 = vpop.f32.mrf.mxu0
    %800 = vdwg.mxu0
    %v801 = vadd.f32 %v686, %v795
    %v802 = vadd.f32 %v689, %v798
    %v803 = vld [vmem:[%s6] sm:$0x1]
    %v805 = vlaneseq
    %v806 = vshrl.u32 %v805, 7
    %v807 = vsub.s32 0, %v806
    %v808 = vrot.slane %v803, %v807
    %v810 = vadd.f32 %v801, %v808
    %v811 = vadd.f32 %v802, %v808
    %812 = vst [vmem:[#allocation10] sm:$0xff] %v810
    %813 = vst [vmem:[#allocation10 + $0x8] sm:$0xf] %v811
    %v814 = vld [vmem:[#allocation7] sm:$0xf]
    %v815 = vld [vmem:[#allocation7 + $0x4] sm:$0xf]
    %v816 = vld [vmem:[#allocation7 + $0x8] sm:$0xf]
    %v817 = vld [vmem:[#allocation7 + $0xc] sm:$0xf]
    %v818 = vld [vmem:[#allocation7 + $0x10] sm:$0xf]
    %v819 = vld [vmem:[#allocation7 + $0x14] sm:$0xf]
    %v820 = vld [vmem:[#allocation7 + $0x18] sm:$0xf]
    %v821 = vld [vmem:[#allocation7 + $0x1c] sm:$0xf]
    %v822 = vld [vmem:[#allocation7 + $0x20] sm:$0xf]
    %v823 = vld [vmem:[#allocation7 + $0x24] sm:$0xf]
    %v824 = vld [vmem:[#allocation7 + $0x28] sm:$0xf]
    %v825 = vld [vmem:[#allocation7 + $0x2c] sm:$0xf]
    %v826 = vld [vmem:[#allocation7 + $0x30] sm:$0xf]
    %v827 = vld [vmem:[#allocation7 + $0x34] sm:$0xf]
    %v828 = vld [vmem:[#allocation7 + $0x38] sm:$0xf]
    %v829 = vld [vmem:[#allocation7 + $0x3c] sm:$0xf]
    %v830 = vld [vmem:[%s489] sm:$0xf]
    %v831 = vld [vmem:[%s489 + $0x4] sm:$0xf]
    %v832 = vld [vmem:[%s489 + $0x8] sm:$0xf]
    %v833 = vld [vmem:[%s489 + $0xc] sm:$0xf]
    %v834 = vld [vmem:[%s489 + $0x10] sm:$0xf]
    %v835 = vld [vmem:[%s489 + $0x14] sm:$0xf]
    %v836 = vld [vmem:[%s489 + $0x18] sm:$0xf]
    %v837 = vld [vmem:[%s489 + $0x1c] sm:$0xf]
    %v838 = vld [vmem:[%s489 + $0x20] sm:$0xf]
    %v839 = vld [vmem:[%s489 + $0x24] sm:$0xf]
    %v840 = vld [vmem:[%s489 + $0x28] sm:$0xf]
    %v841 = vld [vmem:[%s489 + $0x2c] sm:$0xf]
    %v842 = vld [vmem:[%s489 + $0x30] sm:$0xf]
    %v843 = vld [vmem:[%s489 + $0x34] sm:$0xf]
    %v844 = vld [vmem:[%s489 + $0x38] sm:$0xf]
    %v845 = vld [vmem:[%s489 + $0x3c] sm:$0xf]
    %vm846 = vsmask.f32 256
    %v847 = vrot.slane %v507, 7
    %v849 = vshrl.u32 %v472, 16
    %v851 = vrot.slane %v849, 7
    %v852 = vshll.u32 %v472, 16
    %v854 = vor.u32 %v851, %v852
    %v855 = vsel %vm846, %v847, %v854
    %v873 = vunpack.c.l.b16 %v830
    %v874 = vunpack.c.l.b16 %v831
    %v875 = vunpack.c.l.b16 %v832
    %v876 = vunpack.c.l.b16 %v833
    %v877 = vunpack.c.l.b16 %v834
    %v878 = vunpack.c.l.b16 %v835
    %v879 = vunpack.c.l.b16 %v836
    %v880 = vunpack.c.l.b16 %v837
    %v881 = vunpack.c.l.b16 %v838
    %v882 = vunpack.c.l.b16 %v839
    %v883 = vunpack.c.l.b16 %v840
    %v884 = vunpack.c.l.b16 %v841
    %v885 = vunpack.c.l.b16 %v842
    %v886 = vunpack.c.l.b16 %v843
    %v887 = vunpack.c.l.b16 %v844
    %v888 = vunpack.c.l.b16 %v845
    %v889 = vpack.c.b16 %v874, %v873
    %v890 = vpack.c.b16 %v876, %v875
    %v891 = vpack.c.b16 %v878, %v877
    %v892 = vpack.c.b16 %v880, %v879
    %v893 = vpack.c.b16 %v882, %v881
    %v894 = vpack.c.b16 %v884, %v883
    %v895 = vpack.c.b16 %v886, %v885
    %v896 = vpack.c.b16 %v888, %v887
    %905 = vmatprep.subr.bf16.mxu0 0
    %906 = vmatpush1.bf16.msra.mxu0 %v896
    %907 = vmatprep.subr.bf16.mxu0 0
    %908 = vmatpush1.bf16.msra.mxu0 %v895
    %909 = vmatprep.subr.bf16.mxu0 0
    %910 = vmatpush1.bf16.msra.mxu0 %v894
    %911 = vmatprep.subr.bf16.mxu0 0
    %912 = vmatpush1.bf16.msra.mxu0 %v893
    %913 = vmatprep.subr.bf16.mxu0 0
    %914 = vmatpush1.bf16.msra.mxu0 %v892
    %915 = vmatprep.subr.bf16.mxu0 0
    %916 = vmatpush1.bf16.msra.mxu0 %v891
    %917 = vmatprep.subr.bf16.mxu0 0
    %918 = vmatpush1.bf16.msra.mxu0 %v890
    %919 = vmatprep.subr.bf16.mxu0 0
    %920 = vmatpush1.bf16.msra.mxu0 %v889
    %921 = vmatprep.subr.bf16.mxu0 0
    %922 = vmatpush2.bf16.msra.mxu0 0
    %923 = vmatprep.subr.bf16.mxu0 0
    %924 = vmatpush2.bf16.msra.mxu0 0
    %925 = vmatprep.subr.bf16.mxu0 0
    %926 = vmatpush2.bf16.msra.mxu0 0
    %927 = vmatprep.subr.bf16.mxu0 0
    %928 = vmatpush2.bf16.msra.mxu0 0
    %929 = vmatprep.subr.bf16.mxu0 0
    %930 = vmatpush2.bf16.msra.mxu0 0
    %931 = vmatprep.subr.bf16.mxu0 0
    %932 = vmatpush2.bf16.msra.mxu0 0
    %933 = vmatprep.subr.bf16.mxu0 0
    %934 = vmatpush2.bf16.msra.mxu0 0
    %935 = vmatprep.subr.bf16.mxu0 0
    %936 = vmatpush2.bf16.msra.mxu0 0
    %937 = vmatprep.mubr.bf16.mxu0 0
    %938 = vmatmul.mubr.bf16.gmra.mxu0 %v855
    %v939 = vpop.f32.mrf.mxu0
    %v940 = vadd.f32 0.0, %v939
    %v941 = vpop.f32.mrf.mxu0
    %v942 = vpop.f32.mrf.mxu0
    %v943 = vadd.f32 0.0, %v942
    %v944 = vpop.f32.mrf.mxu0
    %945 = vdwg.mxu0
    %vm947 = vcmask 1040384
    %v948 = vrot.slane %v471, 7
    %v949 = vrot.slane %v472, 7
    %v950 = vsel %vm947, %v948, %v949
    %v968 = vunpack.c.l.b16 %v814
    %v969 = vunpack.c.l.b16 %v815
    %v970 = vunpack.c.l.b16 %v816
    %v971 = vunpack.c.l.b16 %v817
    %v972 = vunpack.c.l.b16 %v818
    %v973 = vunpack.c.l.b16 %v819
    %v974 = vunpack.c.l.b16 %v820
    %v975 = vunpack.c.l.b16 %v821
    %v976 = vunpack.c.l.b16 %v822
    %v977 = vunpack.c.l.b16 %v823
    %v978 = vunpack.c.l.b16 %v824
    %v979 = vunpack.c.l.b16 %v825
    %v980 = vunpack.c.l.b16 %v826
    %v981 = vunpack.c.l.b16 %v827
    %v982 = vunpack.c.l.b16 %v828
    %v983 = vunpack.c.l.b16 %v829
    %v984 = vpack.c.b16 %v969, %v968
    %v985 = vpack.c.b16 %v971, %v970
    %v986 = vpack.c.b16 %v973, %v972
    %v987 = vpack.c.b16 %v975, %v974
    %v988 = vpack.c.b16 %v977, %v976
    %v989 = vpack.c.b16 %v979, %v978
    %v990 = vpack.c.b16 %v981, %v980
    %v991 = vpack.c.b16 %v983, %v982
    %1000 = vmatprep.subr.bf16.mxu0 0
    %1001 = vmatpush1.bf16.msra.mxu0 %v991
    %1002 = vmatprep.subr.bf16.mxu0 0
    %1003 = vmatpush1.bf16.msra.mxu0 %v990
    %1004 = vmatprep.subr.bf16.mxu0 0
    %1005 = vmatpush1.bf16.msra.mxu0 %v989
    %1006 = vmatprep.subr.bf16.mxu0 0
    %1007 = vmatpush1.bf16.msra.mxu0 %v988
    %1008 = vmatprep.subr.bf16.mxu0 0
    %1009 = vmatpush1.bf16.msra.mxu0 %v987
    %1010 = vmatprep.subr.bf16.mxu0 0
    %1011 = vmatpush1.bf16.msra.mxu0 %v986
    %1012 = vmatprep.subr.bf16.mxu0 0
    %1013 = vmatpush1.bf16.msra.mxu0 %v985
    %1014 = vmatprep.subr.bf16.mxu0 0
    %1015 = vmatpush1.bf16.msra.mxu0 %v984
    %1016 = vmatprep.subr.bf16.mxu0 0
    %1017 = vmatpush2.bf16.msra.mxu0 0
    %1018 = vmatprep.subr.bf16.mxu0 0
    %1019 = vmatpush2.bf16.msra.mxu0 0
    %1020 = vmatprep.subr.bf16.mxu0 0
    %1021 = vmatpush2.bf16.msra.mxu0 0
    %1022 = vmatprep.subr.bf16.mxu0 0
    %1023 = vmatpush2.bf16.msra.mxu0 0
    %1024 = vmatprep.subr.bf16.mxu0 0
    %1025 = vmatpush2.bf16.msra.mxu0 0
    %1026 = vmatprep.subr.bf16.mxu0 0
    %1027 = vmatpush2.bf16.msra.mxu0 0
    %1028 = vmatprep.subr.bf16.mxu0 0
    %1029 = vmatpush2.bf16.msra.mxu0 0
    %1030 = vmatprep.subr.bf16.mxu0 0
    %1031 = vmatpush2.bf16.msra.mxu0 0
    %1032 = vmatprep.mubr.bf16.mxu0 0
    %1033 = vmatmul.mubr.bf16.gmra.mxu0 %v950
    %v1034 = vpop.f32.mrf.mxu0
    %v1035 = vadd.f32 %v940, %v1034
    %v1036 = vpop.f32.mrf.mxu0
    %v1037 = vpop.f32.mrf.mxu0
    %v1038 = vadd.f32 %v943, %v1037
    %v1039 = vpop.f32.mrf.mxu0
    %1040 = vdwg.mxu0
    %v1041 = vld [vmem:[%s692] sm:$0xf]
    %v1042 = vld [vmem:[%s692 + $0x4] sm:$0xf]
    %v1043 = vld [vmem:[%s692 + $0x8] sm:$0xf]
    %v1044 = vld [vmem:[%s692 + $0xc] sm:$0xf]
    %v1045 = vld [vmem:[%s692 + $0x10] sm:$0xf]
    %v1046 = vld [vmem:[%s692 + $0x14] sm:$0xf]
    %v1047 = vld [vmem:[%s692 + $0x18] sm:$0xf]
    %v1048 = vld [vmem:[%s692 + $0x1c] sm:$0xf]
    %v1049 = vld [vmem:[%s692 + $0x20] sm:$0xf]
    %v1050 = vld [vmem:[%s692 + $0x24] sm:$0xf]
    %v1051 = vld [vmem:[%s692 + $0x28] sm:$0xf]
    %v1052 = vld [vmem:[%s692 + $0x2c] sm:$0xf]
    %v1053 = vld [vmem:[%s692 + $0x30] sm:$0xf]
    %v1054 = vld [vmem:[%s692 + $0x34] sm:$0xf]
    %v1055 = vld [vmem:[%s692 + $0x38] sm:$0xf]
    %v1056 = vld [vmem:[%s692 + $0x3c] sm:$0xf]
    %v1073 = vunpack.c.l.b16 %v1041
    %v1074 = vunpack.c.l.b16 %v1042
    %v1075 = vunpack.c.l.b16 %v1043
    %v1076 = vunpack.c.l.b16 %v1044
    %v1077 = vunpack.c.l.b16 %v1045
    %v1078 = vunpack.c.l.b16 %v1046
    %v1079 = vunpack.c.l.b16 %v1047
    %v1080 = vunpack.c.l.b16 %v1048
    %v1081 = vunpack.c.l.b16 %v1049
    %v1082 = vunpack.c.l.b16 %v1050
    %v1083 = vunpack.c.l.b16 %v1051
    %v1084 = vunpack.c.l.b16 %v1052
    %v1085 = vunpack.c.l.b16 %v1053
    %v1086 = vunpack.c.l.b16 %v1054
    %v1087 = vunpack.c.l.b16 %v1055
    %v1088 = vunpack.c.l.b16 %v1056
    %v1089 = vpack.c.b16 %v1074, %v1073
    %v1090 = vpack.c.b16 %v1076, %v1075
    %v1091 = vpack.c.b16 %v1078, %v1077
    %v1092 = vpack.c.b16 %v1080, %v1079
    %v1093 = vpack.c.b16 %v1082, %v1081
    %v1094 = vpack.c.b16 %v1084, %v1083
    %v1095 = vpack.c.b16 %v1086, %v1085
    %v1096 = vpack.c.b16 %v1088, %v1087
    %1105 = vmatprep.subr.bf16.mxu0 0
    %1106 = vmatpush1.bf16.msra.mxu0 %v1096
    %1107 = vmatprep.subr.bf16.mxu0 0
    %1108 = vmatpush1.bf16.msra.mxu0 %v1095
    %1109 = vmatprep.subr.bf16.mxu0 0
    %1110 = vmatpush1.bf16.msra.mxu0 %v1094
    %1111 = vmatprep.subr.bf16.mxu0 0
    %1112 = vmatpush1.bf16.msra.mxu0 %v1093
    %1113 = vmatprep.subr.bf16.mxu0 0
    %1114 = vmatpush1.bf16.msra.mxu0 %v1092
    %1115 = vmatprep.subr.bf16.mxu0 0
    %1116 = vmatpush1.bf16.msra.mxu0 %v1091
    %1117 = vmatprep.subr.bf16.mxu0 0
    %1118 = vmatpush1.bf16.msra.mxu0 %v1090
    %1119 = vmatprep.subr.bf16.mxu0 0
    %1120 = vmatpush1.bf16.msra.mxu0 %v1089
    %1121 = vmatprep.subr.bf16.mxu0 0
    %1122 = vmatpush2.bf16.msra.mxu0 0
    %1123 = vmatprep.subr.bf16.mxu0 0
    %1124 = vmatpush2.bf16.msra.mxu0 0
    %1125 = vmatprep.subr.bf16.mxu0 0
    %1126 = vmatpush2.bf16.msra.mxu0 0
    %1127 = vmatprep.subr.bf16.mxu0 0
    %1128 = vmatpush2.bf16.msra.mxu0 0
    %1129 = vmatprep.subr.bf16.mxu0 0
    %1130 = vmatpush2.bf16.msra.mxu0 0
    %1131 = vmatprep.subr.bf16.mxu0 0
    %1132 = vmatpush2.bf16.msra.mxu0 0
    %1133 = vmatprep.subr.bf16.mxu0 0
    %1134 = vmatpush2.bf16.msra.mxu0 0
    %1135 = vmatprep.subr.bf16.mxu0 0
    %1136 = vmatpush2.bf16.msra.mxu0 0
    %1137 = vmatprep.mubr.bf16.mxu0 0
    %1138 = vmatmul.mubr.bf16.gmra.mxu0 %v472
    %v1139 = vpop.f32.mrf.mxu0
    %v1140 = vadd.f32 0.0, %v1139
    %v1141 = vpop.f32.mrf.mxu0
    %v1142 = vpop.f32.mrf.mxu0
    %v1143 = vadd.f32 0.0, %v1142
    %v1144 = vpop.f32.mrf.mxu0
    %1145 = vdwg.mxu0
    %v1146 = vadd.f32 %v1035, %v1140
    %v1147 = vadd.f32 %v1038, %v1143
    %v1148 = vld [vmem:[%s6] sm:$0x1]
    %v1150 = vlaneseq
    %v1151 = vshrl.u32 %v1150, 7
    %v1152 = vsub.s32 0, %v1151
    %v1153 = vrot.slane %v1148, %v1152
    %v1155 = vadd.f32 %v1146, %v1153
    %v1156 = vadd.f32 %v1147, %v1153
    %1157 = vst [vmem:[#allocation10 + $0xc] sm:$0xff] %v1155
    %1158 = vst [vmem:[#allocation10 + $0x14] sm:$0xf] %v1156
    // Predicated region
    $region46: #{tpu_custom_call.1} parent=1 // pred_check
      _
    $region47: #{tpu_custom_call.1} parent=1 // pred_check_branch
      %1160 = sbr.rel (0) target = $region49
    $region48: #{tpu_custom_call.1} parent=1 // pred_region
      %s1162 = ssub.s32 384, 384
      %1163 = vsyncadd [#allocation4], %s1162
      %s1164 = sshll.u32 [#allocation10], 4
      %s1165 = int_to_ptr.vmem [resolvable:$true] %s1164
      %1170 = dma.vmem_to_hbm [thread:$0]  %s1165, 384, %s7, [#allocation4], 128, 128, 8
    $region49: #{tpu_custom_call.1} parent=1 // pred_fallthru
      _
    // Predicated region
    $region50: #{tpu_custom_call.1} parent=1 // pred_check
      _
    $region51: #{tpu_custom_call.1} parent=1 // pred_check_branch
      %1172 = sbr.rel (0) target = $region53
    $region52: #{tpu_custom_call.1} parent=1 // pred_region
      %1173 = dma.done [#allocation4], 384
    $region53: #{tpu_custom_call.1} parent=1 // pred_fallthru
      _
    %1174 = vsyncpa [#allocation3], 1
    %1175 = vsyncpa [#allocation6], 1
    %1176 = vsyncpa [#allocation9], 1
    %1177 = vsyncpa [#allocation4], 1

</llo_original>
